<compile_context>
chip_gen: v7x
topology: tpu7x:2x2x1
jax: 0.10.0
libtpu: 0.0.40
codegen_flags: <defaults>
</compile_context>

<pallas_src>
import functools
import math

import jax
import jax.numpy as jnp
from jax import lax
from jax.experimental import pallas as pl
from jax.experimental.pallas import tpu as pltpu


def _arcface_kernel(x_ref, w_ref, label_ref, o_ref, *, s, cos_m, sin_m, th, mm):
    # x_ref:     [tb, E] bf16, already L2-normalized rows
    # w_ref:     [tc, E] bf16, already L2-normalized rows (streamed over C)
    # label_ref: [tb, 1] int32 (global class id, -1 for padded rows)
    # o_ref:     [tb, tc] f32
    #
    # cosine = xn @ wn.T without an explicit transpose: contract dim 1 of both.
    cosine = lax.dot_general(
        x_ref[...], w_ref[...],
        dimension_numbers=(((1,), (1,)), ((), ())),
        preferred_element_type=jnp.float32)              # [tb, tc] f32 (MXU)

    tb, tc = o_ref.shape
    col0 = pl.program_id(1) * tc
    lane = lax.broadcasted_iota(jnp.int32, (1, tc), dimension=1)   # [1, tc]
    mask = lane == (label_ref[...] - col0)                         # [tb, tc] bool

    # Target-column-only epilogue: phi is consumed at exactly one column per
    # row, so extract that column ([tb, 1]), do the sqrt / margin / threshold
    # there, and scatter it back with the same mask.
    target_cos = jnp.sum(jnp.where(mask, cosine, 0.0), axis=-1, keepdims=True)
    sine = jnp.sqrt(jnp.clip(1.0 - target_cos * target_cos, 0.0, 1.0))
    phi = target_cos * cos_m - sine * sin_m
    phi = jnp.where(target_cos > th, phi, target_cos - mm)         # [tb, 1]

    out = jnp.where(mask, phi, cosine)                             # [tb, tc]
    o_ref[...] = (out * s).astype(o_ref.dtype)


def _round_up(n, d):
    return ((n + d - 1) // d) * d


# Double-buffered data tiles (bf16 x, bf16 W, f32 out) must fit this budget on
# every generation (v7x: 64 MiB physical / 32 MiB default scoped VMEM).
_VMEM_TILE_BUDGET = 26 * 1024 * 1024
_VMEM_LIMIT_BYTES = 40 * 1024 * 1024


def _default_tc(C, E, budget=_VMEM_TILE_BUDGET):
    """Class tile: whole C if <=2048, else the largest of {2048,...,128} that
    leaves room for at least an 8-row batch tile."""
    c_full = _round_up(C, 128)
    candidates = ([c_full] if c_full <= 2048 else [2048, 1024, 512, 256]) + [128]
    for tc in candidates:
        if tc > c_full:
            continue
        w_bytes = 2 * tc * E * 2                       # bf16 W tile, x2 buffers
        per_row = 2 * E * 2 + 2 * tc * 4               # bf16 x + f32 out, x2 buffers
        if w_bytes + 8 * per_row <= budget:
            return int(tc)
    return 128


def _max_tb(B, tc, E, budget=_VMEM_TILE_BUDGET):
    """Batch tile: as large as fits (ideally the whole batch -> W streamed once)."""
    w_bytes = 2 * tc * E * 2
    per_row = 2 * E * 2 + 2 * tc * 4
    tb_max = max(8, ((budget - w_bytes) // per_row) // 8 * 8)
    return int(min(_round_up(B, 8), tb_max))


def arcface_forward(x, weight, label, *, s=30.0, m=0.5, tb=None, tc=None):
    """ArcFace forward.  x: [B, E] f32, weight: [C, E] f32, label: [B] int."""
    B, E = x.shape
    C, E2 = weight.shape
    assert E == E2

    if tc is None:
        tc = _default_tc(C, E)
    if tb is None:
        tb = _max_tb(B, tc, E)
    assert tb % 8 == 0 and tc % 128 == 0

    # Hoisted normalization + bf16 cast (F.normalize: v * rsqrt(max(|v|^2, eps^2))).
    eps2 = 1e-24
    xf = x.astype(jnp.float32)
    wf = weight.astype(jnp.float32)
    xn = (xf * lax.rsqrt(jnp.maximum(jnp.sum(xf * xf, axis=-1, keepdims=True),
                                     eps2))).astype(jnp.bfloat16)
    wn = (wf * lax.rsqrt(jnp.maximum(jnp.sum(wf * wf, axis=-1, keepdims=True),
                                     eps2))).astype(jnp.bfloat16)

    Bp = _round_up(B, tb)
    Cp = _round_up(C, tc)

    xp = xn if Bp == B else jnp.pad(xn, ((0, Bp - B), (0, 0)))
    wp = wn if Cp == C else jnp.pad(wn, ((0, Cp - C), (0, 0)))
    lab = label.astype(jnp.int32).reshape(B, 1)
    labp = lab if Bp == B else jnp.pad(lab, ((0, Bp - B), (0, 0)),
                                       constant_values=-1)

    cos_m = math.cos(m)
    sin_m = math.sin(m)
    th = math.cos(math.pi - m)
    mm = math.sin(math.pi - m) * m

    kernel = functools.partial(_arcface_kernel, s=s, cos_m=cos_m,
                               sin_m=sin_m, th=th, mm=mm)

    out = pl.pallas_call(
        kernel,
        out_shape=jax.ShapeDtypeStruct((Bp, Cp), jnp.float32),
        grid=(Bp // tb, Cp // tc),
        in_specs=[
            pl.BlockSpec((tb, E), lambda i, j: (i, 0)),   # normalized x (bf16)
            pl.BlockSpec((tc, E), lambda i, j: (j, 0)),   # normalized W (bf16, streamed)
            pl.BlockSpec((tb, 1), lambda i, j: (i, 0)),   # label column
        ],
        out_specs=pl.BlockSpec((tb, tc), lambda i, j: (i, j)),
        compiler_params=pltpu.CompilerParams(
            # Megacore split (v7x) on the class axis so each TC streams a
            # disjoint half of W; batch axis stays sequential.
            dimension_semantics=("arbitrary", "parallel"),
            vmem_limit_bytes=_VMEM_LIMIT_BYTES),
    )(xp, wp, labp)

    if Bp != B or Cp != C:
        # Only taken when padding was required (pick tc | C to avoid it).
        out = out[:B, :C]
    return out


def _reference(x, weight, label, *, s=30.0, m=0.5, matmul_dtype=jnp.float32):
    """Pure-JAX reference mirroring the PyTorch module (optionally bf16 matmul)."""
    cos_m, sin_m = math.cos(m), math.sin(m)
    th = math.cos(math.pi - m)
    mm = math.sin(math.pi - m) * m
    eps2 = 1e-24
    xn = x * lax.rsqrt(jnp.maximum(jnp.sum(x * x, axis=1, keepdims=True), eps2))
    wn = weight * lax.rsqrt(jnp.maximum(jnp.sum(weight * weight, axis=1,
                                                keepdims=True), eps2))
    cosine = jnp.dot(xn.astype(matmul_dtype), wn.astype(matmul_dtype).T,
                     preferred_element_type=jnp.float32)
    sine = jnp.sqrt(jnp.clip(1.0 - cosine**2, 0.0, 1.0))
    phi = cosine * cos_m - sine * sin_m
    phi = jnp.where(cosine > th, phi, cosine - mm)
    onehot = jax.nn.one_hot(label, weight.shape[0], dtype=bool)
    return jnp.where(onehot, phi, cosine) * s


if __name__ == "__main__":
    key = jax.random.PRNGKey(0)
    # batch, embedding_size, class_num — small, but exercises a (1, 2) grid
    # with lane-dense 512-wide class tiles and the per-tile column offset.
    B, E, C = 32, 256, 1024

    kx, kw, kl = jax.random.split(key, 3)
    x = jax.random.normal(kx, (B, E), dtype=jnp.float32)

    # Deterministic Xavier-uniform init for weight [class_num, embedding_size].
    bound = math.sqrt(6.0 / (C + E))
    weight = jax.random.uniform(kw, (C, E), minval=-bound, maxval=bound,
                                dtype=jnp.float32)
    label = jax.random.randint(kl, (B,), 0, C, dtype=jnp.int32)

    # tb defaults to the full batch (32); tc=512 forces a multi-tile class grid.
    out = arcface_forward(x, weight, label, s=30.0, m=0.5, tc=512)
    out = jax.block_until_ready(out)
    assert out.shape == (B, C)

    # Check 1: same-precision reference (bf16 matmul, f32 accumulate) — tight.
    ref_bf16 = _reference(x, weight, label, s=30.0, m=0.5,
                          matmul_dtype=jnp.bfloat16)
    assert jnp.allclose(out, ref_bf16, atol=1e-2, rtol=1e-2), \
        "mismatch vs bf16-matmul reference"

    # Check 2: full-f32 PyTorch-equivalent reference — loose bound covering the
    # bf16 matmul rounding amplified by s=30.
    ref_f32 = _reference(x, weight, label, s=30.0, m=0.5,
                         matmul_dtype=jnp.float32)
    assert jnp.allclose(out, ref_f32, atol=0.15, rtol=0.02), \
        "mismatch vs f32 reference"

    print("KERNEL_OK")
</pallas_src>

<mosaic_0001>
module attributes {stable_mosaic.version = 11 : i64} {
  func.func @_arcface_kernel(%arg0: i32, %arg1: i32, %arg2: memref<32x256xbf16, #tpu.memory_space<vmem>>, %arg3: memref<512x256xbf16, #tpu.memory_space<vmem>>, %arg4: memref<32x1xi32, #tpu.memory_space<vmem>>, %arg5: memref<32x512xf32, #tpu.memory_space<vmem>>) attributes {dimension_semantics = [#tpu.dimension_semantics<arbitrary>, #tpu.dimension_semantics<parallel>], iteration_bounds = array<i64: 1, 2>, scalar_prefetch = 0 : i64, scratch_operands = 0 : i64, tpu.core_type = #tpu.core_type<tc>, window_params = [{transform_indices = @transform_0, window_bounds = array<i64: 32, 256>}, {transform_indices = @transform_1, window_bounds = array<i64: 512, 256>}, {transform_indices = @transform_2, window_bounds = array<i64: 32, 1>}, {transform_indices = @transform_3, window_bounds = array<i64: 32, 512>}]} {
    %c0 = arith.constant 0 : index
    %c0_0 = arith.constant 0 : index
    %0 = vector.load %arg2[%c0, %c0_0] : memref<32x256xbf16, #tpu.memory_space<vmem>>, vector<32x256xbf16>
    %c0_1 = arith.constant 0 : index
    %c0_2 = arith.constant 0 : index
    %1 = vector.load %arg3[%c0_1, %c0_2] : memref<512x256xbf16, #tpu.memory_space<vmem>>, vector<512x256xbf16>
    %cst = arith.constant dense<0.000000e+00> : vector<32x512xf32>
    %2 = tpu.matmul %0, %1, %cst {dimension_numbers = #tpu.dot_dimension_numbers<[1], [1], [0], [0], [0, 0, 1, 0], [], []>} : vector<32x256xbf16>, vector<512x256xbf16>, vector<32x512xf32> -> vector<32x512xf32>
    %c512_i32 = arith.constant 512 : i32
    %3 = arith.muli %arg1, %c512_i32 : i32
    %4 = tpu.iota {dimensions = array<i32: 1>} : vector<1x512xi32>
    %c0_3 = arith.constant 0 : index
    %c0_4 = arith.constant 0 : index
    %5 = vector.load %arg4[%c0_3, %c0_4] : memref<32x1xi32, #tpu.memory_space<vmem>>, vector<32x1xi32>
    %6 = vector.broadcast %3 : i32 to vector<32x1xi32>
    %7 = arith.subi %5, %6 : vector<32x1xi32>
    %8 = vector.broadcast %4 : vector<1x512xi32> to vector<32x512xi32>
    %9 = vector.broadcast %7 : vector<32x1xi32> to vector<32x512xi32>
    %10 = arith.cmpi eq, %8, %9 : vector<32x512xi32>
    %cst_5 = arith.constant 0.000000e+00 : f32
    %11 = vector.broadcast %cst_5 : f32 to vector<32x512xf32>
    %12 = arith.select %10, %2, %11 : vector<32x512xi1>, vector<32x512xf32>
    %cst_6 = arith.constant dense<0.000000e+00> : vector<32xf32>
    %13 = vector.multi_reduction <add>, %12, %cst_6 [1] : vector<32x512xf32> to vector<32xf32>
    %14 = vector.shape_cast %13 : vector<32xf32> to vector<32x1xf32>
    %15 = arith.mulf %14, %14 : vector<32x1xf32>
    %cst_7 = arith.constant 1.000000e+00 : f32
    %16 = vector.broadcast %cst_7 : f32 to vector<32x1xf32>
    %17 = arith.subf %16, %15 : vector<32x1xf32>
    %cst_8 = arith.constant 0.000000e+00 : f32
    %cst_9 = arith.constant 1.000000e+00 : f32
    %18 = vector.broadcast %cst_8 : f32 to vector<32x1xf32>
    %19 = arith.maximumf %18, %17 : vector<32x1xf32>
    %20 = vector.broadcast %cst_9 : f32 to vector<32x1xf32>
    %21 = arith.minimumf %20, %19 : vector<32x1xf32>
    %22 = math.sqrt %21 : vector<32x1xf32>
    %cst_10 = arith.constant 0.87758255 : f32
    %23 = vector.broadcast %cst_10 : f32 to vector<32x1xf32>
    %24 = arith.mulf %14, %23 : vector<32x1xf32>
    %cst_11 = arith.constant 0.47942555 : f32
    %25 = vector.broadcast %cst_11 : f32 to vector<32x1xf32>
    %26 = arith.mulf %22, %25 : vector<32x1xf32>
    %27 = arith.subf %24, %26 : vector<32x1xf32>
    %cst_12 = arith.constant -0.87758255 : f32
    %28 = vector.broadcast %cst_12 : f32 to vector<32x1xf32>
    %29 = arith.cmpf ogt, %14, %28 : vector<32x1xf32>
    %cst_13 = arith.constant 0.239712775 : f32
    %30 = vector.broadcast %cst_13 : f32 to vector<32x1xf32>
    %31 = arith.subf %14, %30 : vector<32x1xf32>
    %32 = arith.select %29, %27, %31 : vector<32x1xi1>, vector<32x1xf32>
    %33 = vector.shape_cast %32 : vector<32x1xf32> to vector<32x1xf32>
    %34 = vector.broadcast %33 : vector<32x1xf32> to vector<32x512xf32>
    %35 = arith.select %10, %34, %2 : vector<32x512xi1>, vector<32x512xf32>
    %cst_14 = arith.constant 3.000000e+01 : f32
    %36 = vector.broadcast %cst_14 : f32 to vector<32x512xf32>
    %37 = arith.mulf %35, %36 : vector<32x512xf32>
    %c0_15 = arith.constant 0 : index
    %c0_16 = arith.constant 0 : index
    %38 = vector.load %arg5[%c0_15, %c0_16] : memref<32x512xf32, #tpu.memory_space<vmem>>, vector<32x512xf32>
    tpu.vector_store %arg5[%c0_15, %c0_16], %37 {strides = array<i32>} : memref<32x512xf32, #tpu.memory_space<vmem>>, vector<32x512xf32>,
    return
  }
  func.func @transform_0(%arg0: i32, %arg1: i32) -> (i32, i32) {
    %c0_i32 = arith.constant 0 : i32
    %c0_i32_0 = arith.constant 0 : i32
    return %arg0, %c0_i32 : i32, i32
  }
  func.func @transform_1(%arg0: i32, %arg1: i32) -> (i32, i32) {
    %c0_i32 = arith.constant 0 : i32
    %c0_i32_0 = arith.constant 0 : i32
    return %arg1, %c0_i32 : i32, i32
  }
  func.func @transform_2(%arg0: i32, %arg1: i32) -> (i32, i32) {
    %c0_i32 = arith.constant 0 : i32
    %c0_i32_0 = arith.constant 0 : i32
    return %arg0, %c0_i32 : i32, i32
  }
  func.func @transform_3(%arg0: i32, %arg1: i32) -> (i32, i32) {
    %c0_i32 = arith.constant 0 : i32
    return %arg0, %arg1 : i32, i32
  }
}

</mosaic_0001>

<llo_original>
// kernel: tpu_custom_call.1
$region0: #{tpu_custom_call.1}
  #allocation0 [shape = 'u32[]', space=smem, size = 0x4, offset = 0x4, fixed_abs, tag = 'smem constant byte address 0x4 - core index']
  #allocation1 [shape = 'u32[144,128]{1,0:T(1,128)}', space=vmem, size = 0x12000, scoped, tag = 'internal scratch']
  %s0 = inlined_call_operand.vmem [shape: bf16[32,256], index: 0, kind: input, shape index: {}]
  %s1 = inlined_call_operand.hbm [shape: bf16[1024,256], index: 1, kind: input, shape index: {}]
  %s2 = inlined_call_operand.vmem [shape: s32[32,1], index: 2, kind: input, shape index: {}]
  %s3 = inlined_call_operand.hbm [shape: f32[32,1024], index: 3, kind: output, shape index: {}]
  %s4 = sld [smem:[#allocation0]]
  $region49: #{tpu_custom_call.1} parent=0
    _
  %s6 = ssub.s32 1, %s4
  %s7 = scalar_select 0, %s6, %s4
  $region1: #{tpu_custom_call.1} parent=0
    #allocation2 [shape = 'u8[524288]{0}', space=vmem, size = 0x80000, scoped, tag = 'input window, operand 1']
    #allocation3 [shape = 's32[2]{0}', space=sflag, size = 0x8, scoped, tag = 'scoped memory for tpu_custom_call.1']
    #allocation4 [shape = 's32[2]{0}', space=sflag, size = 0x8, scoped, tag = 'scoped memory for tpu_custom_call.1']
    #allocation5 [shape = 'u8[131072]{0}', space=vmem, size = 0x20000, scoped, tag = 'output window, operand 0']
    %8 = vsyncpa [#allocation3], 0
    %s9 = scalar_lea.sflag [#allocation3], 1
    %10 = vsyncpa %s9, 0
    %11 = vsyncpa [#allocation4], 0
    %s12 = scalar_lea.sflag [#allocation4], 1
    %13 = vsyncpa %s12, 0
    loop: start=0, step=1, limit=4
    $region2: #{tpu_custom_call.1} parent=1 // loop_pre_header
      _
    $region3: #{tpu_custom_call.1} parent=1 // loop_header
      %s15 = sphi 0, %s19
      %p16 = scmp.ge.s32.totalorder %s15, 4
      %s22 = sphi 0, %s34
      %s23 = sphi 0, %s30
      %s24 = sphi 0, %s22
      %s25 = sphi 0, %s23
      %s26 = sphi 0, %s24
      %s27 = sphi 0, %s25
      %s37 = sphi 0, %s39
      %s40 = sphi 0, %s37
      %s41 = sphi 0, %s40
      %s57 = sphi 0, %s41
      %s63 = sphi 0, %s65
      %s66 = sphi 0, %s63
      %s67 = sphi 0, %s66
      %s83 = sphi 0, %s67
      %s89 = sphi 0, %s91
      %s92 = sphi 0, %s89
      %s93 = sphi 0, %s92
      %s109 = sphi 0, %s93
      %s117 = sphi 0, %s119
      %s120 = sphi 0, %s117
      %s121 = sphi 0, %s120
      %s137 = sphi 0, %s121
    $region4: #{tpu_custom_call.1} parent=1 // loop_header_branch
      %18 = sbr.rel (%p16) target = $region8
    $region5: #{tpu_custom_call.1} parent=1 // loop_body
      %s20 = ssub.s32 %s15, 1
      %s21 = ssub.s32 %s15, 2
      %s28 = sadd.s32 1, %s23
      %p29 = scmp.ge.s32.totalorder %s28, 2
      %s30 = scalar_select %p29, 0, %s28
      %s31 = sadd.s32 1, %s22
      %s32 = scalar_select %p29, %s31, %s22
      %p33 = scmp.ge.s32.totalorder %s32, 1
      %s34 = scalar_select %p33, 0, %s32
      %s35 = ssub.s32 %s22, %s34
      %p36 = scmp.eq.s32.totalorder %s35, 0
      %s38 = sadd.s32 %s37, 1
      %s39 = scalar_select %p36, %s37, %s38
      %p42 = pneg %p36
      %p43 = scmp.eq.s32.totalorder %s15, 1
      %p44 = por %p42, %p43
      %p45 = scmp.ne.s32.totalorder %s37, %s40
      %p46 = scmp.eq.s32.totalorder %s15, 0
      %p47 = por %p45, %p46
      %p48 = scmp.ne.s32.totalorder %s37, %s40
      %p49 = scmp.eq.s32.totalorder %s20, 1
      %p50 = por %p48, %p49
      %p51 = scmp.ne.s32.totalorder %s40, %s41
      %p52 = scmp.eq.s32.totalorder %s20, 0
      %p53 = por %p51, %p52
      %p54 = scmp.ne.s32.totalorder %s40, %s41
      %p55 = scmp.eq.s32.totalorder %s21, 1
      %p56 = por %p54, %p55
      %p58 = scmp.ne.s32.totalorder %s41, %s57
      %p59 = scmp.eq.s32.totalorder %s21, 0
      %p60 = por %p58, %p59
      %s61 = ssub.s32 %s23, %s30
      %p62 = scmp.eq.s32.totalorder %s61, 0
      %s64 = sadd.s32 %s63, 1
      %s65 = scalar_select %p62, %s63, %s64
      %p68 = pneg %p62
      %p69 = scmp.eq.s32.totalorder %s15, 1
      %p70 = por %p68, %p69
      %p71 = scmp.ne.s32.totalorder %s63, %s66
      %p72 = scmp.eq.s32.totalorder %s15, 0
      %p73 = por %p71, %p72
      %p74 = scmp.ne.s32.totalorder %s63, %s66
      %p75 = scmp.eq.s32.totalorder %s20, 1
      %p76 = por %p74, %p75
      %p77 = scmp.ne.s32.totalorder %s66, %s67
      %p78 = scmp.eq.s32.totalorder %s20, 0
      %p79 = por %p77, %p78
      %p80 = scmp.ne.s32.totalorder %s66, %s67
      %p81 = scmp.eq.s32.totalorder %s21, 1
      %p82 = por %p80, %p81
      %p84 = scmp.ne.s32.totalorder %s67, %s83
      %p85 = scmp.eq.s32.totalorder %s21, 0
      %p86 = por %p84, %p85
      %s87 = ssub.s32 %s22, %s34
      %p88 = scmp.eq.s32.totalorder %s87, 0
      %s90 = sadd.s32 %s89, 1
      %s91 = scalar_select %p88, %s89, %s90
      %p94 = pneg %p88
      %p95 = scmp.eq.s32.totalorder %s15, 1
      %p96 = por %p94, %p95
      %p97 = scmp.ne.s32.totalorder %s89, %s92
      %p98 = scmp.eq.s32.totalorder %s15, 0
      %p99 = por %p97, %p98
      %p100 = scmp.ne.s32.totalorder %s89, %s92
      %p101 = scmp.eq.s32.totalorder %s20, 1
      %p102 = por %p100, %p101
      %p103 = scmp.ne.s32.totalorder %s92, %s93
      %p104 = scmp.eq.s32.totalorder %s20, 0
      %p105 = por %p103, %p104
      %p106 = scmp.ne.s32.totalorder %s92, %s93
      %p107 = scmp.eq.s32.totalorder %s21, 1
      %p108 = por %p106, %p107
      %p110 = scmp.ne.s32.totalorder %s93, %s109
      %p111 = scmp.eq.s32.totalorder %s21, 0
      %p112 = por %p110, %p111
      %s113 = ssub.s32 %s22, %s34
      %s114 = ssub.s32 %s23, %s30
      %s115 = sor.u32 %s113, %s114
      %p116 = scmp.eq.s32.totalorder %s115, 0
      %s118 = sadd.s32 %s117, 1
      %s119 = scalar_select %p116, %s117, %s118
      %p122 = pneg %p116
      %p123 = scmp.eq.s32.totalorder %s15, 1
      %p124 = por %p122, %p123
      %p125 = scmp.ne.s32.totalorder %s117, %s120
      %p126 = scmp.eq.s32.totalorder %s15, 0
      %p127 = por %p125, %p126
      %p128 = scmp.ne.s32.totalorder %s117, %s120
      %p129 = scmp.eq.s32.totalorder %s20, 1
      %p130 = por %p128, %p129
      %p131 = scmp.ne.s32.totalorder %s120, %s121
      %p132 = scmp.eq.s32.totalorder %s20, 0
      %p133 = por %p131, %p132
      %p134 = scmp.ne.s32.totalorder %s120, %s121
      %p135 = scmp.eq.s32.totalorder %s21, 1
      %p136 = por %p134, %p135
      %p138 = scmp.ne.s32.totalorder %s121, %s137
      %p139 = scmp.eq.s32.totalorder %s21, 0
      %p140 = por %p138, %p139
      %p141 = scmp.le.s32.totalorder 1, %s15
      %p142 = scmp.lt.s32.totalorder %s15, 3
      %p143 = pnand %p141, %p142
      %p144 = pneg %p143
      // Predicated region
      $region9: #{tpu_custom_call.1} parent=5 // pred_check
        _
      $region10: #{tpu_custom_call.1} parent=5 // pred_check_branch
        %146 = sbr.rel (%p143) target = $region12
      $region11: #{tpu_custom_call.1} parent=5 // pred_region
        %s147 = ssub.s32 %s15, 1
        // Predicated region
        $region13: #{tpu_custom_call.1} parent=11 // pred_check
          %p148 = pneg %p53
        $region14: #{tpu_custom_call.1} parent=11 // pred_check_branch
          %150 = sbr.rel (%p148) target = $region16
        $region15: #{tpu_custom_call.1} parent=11 // pred_region
          %s151 = smul.u32 4, %s24
          %p152 = scmp.lt.s32.totalorder %s151, 3
          %s153 = scalar_select %p152, %s151, 3
          %s154 = smul.addr %s153, 2
          %s155 = smul.addr %s154, 4
          %s156 = scalar_lea.vmem %s0, %s155
          %s157 = smul.u32 4, %s24
        $region16: #{tpu_custom_call.1} parent=11 // pred_fallthru
          _
        // Predicated region
        $region17: #{tpu_custom_call.1} parent=11 // pred_check
          %p158 = pneg %p105
        $region18: #{tpu_custom_call.1} parent=11 // pred_check_branch
          %160 = sbr.rel (%p158) target = $region20
        $region19: #{tpu_custom_call.1} parent=11 // pred_region
          %s161 = smul.u32 4, %s24
          %p162 = scmp.lt.s32.totalorder %s161, 3
          %s163 = scalar_select %p162, %s161, 3
          %s164 = smul.addr %s163, 8
          %s165 = scalar_lea.vmem %s2, %s164
          %s166 = smul.u32 4, %s24
        $region20: #{tpu_custom_call.1} parent=11 // pred_fallthru
          _
      $region12: #{tpu_custom_call.1} parent=5 // pred_fallthru
        _
      %p167 = scmp.lt.s32.totalorder %s15, 2
      // Predicated region
      $region21: #{tpu_custom_call.1} parent=5 // pred_check
        %p168 = pneg %p167
      $region22: #{tpu_custom_call.1} parent=5 // pred_check_branch
        %170 = sbr.rel (%p168) target = $region24
      $region23: #{tpu_custom_call.1} parent=5 // pred_region
        // Predicated region
        $region25: #{tpu_custom_call.1} parent=23 // pred_check
          %p171 = pneg %p73
        $region26: #{tpu_custom_call.1} parent=23 // pred_check_branch
          %173 = sbr.rel (%p171) target = $region28
        $region27: #{tpu_custom_call.1} parent=23 // pred_region
          %s174 = sand.u32 %s63, 1
          %s175 = scalar_lea.sflag [#allocation3], %s174
          %s176 = sand.u32 %s63, 1
          %s177 = smul.addr %s176, 512
          %s178 = scalar_lea.vmem [#allocation2], %s177
          %s179 = smul.u32 64, %s23
          %s181 = ssub.s32 8192, 8192
          %182 = vsyncadd %s175, %s181
          %s183 = smul.addr %s179, 2
          %s184 = smul.addr %s183, 64
          %s185 = scalar_lea.hbm %s1, %s184
          %s186 = sshll.u32 %s178, 4
          %s187 = int_to_ptr.vmem [resolvable:$true] %s186
          %192 = dma.hbm_to_vmem [thread:$0]  %s185, 8192, %s187, %s175, 128, 128, 8
        $region28: #{tpu_custom_call.1} parent=23 // pred_fallthru
          _
      $region24: #{tpu_custom_call.1} parent=5 // pred_fallthru
        _
      %p193 = scmp.le.s32.totalorder 1, %s15
      %p194 = scmp.lt.s32.totalorder %s15, 3
      %p195 = pnand %p193, %p194
      %p196 = pneg %p195
      // Predicated region
      $region29: #{tpu_custom_call.1} parent=5 // pred_check
        _
      $region30: #{tpu_custom_call.1} parent=5 // pred_check_branch
        %198 = sbr.rel (%p195) target = $region32
      $region31: #{tpu_custom_call.1} parent=5 // pred_region
        %s199 = ssub.s32 %s15, 1
        %s200 = sand.u32 %s66, 1
        %s201 = scalar_lea.sflag [#allocation3], %s200
        %s202 = sand.u32 %s66, 1
        %s203 = smul.addr %s202, 512
        %s204 = scalar_lea.vmem [#allocation2], %s203
        // Predicated region
        $region33: #{tpu_custom_call.1} parent=31 // pred_check
          %p205 = pneg %p79
        $region34: #{tpu_custom_call.1} parent=31 // pred_check_branch
          %207 = sbr.rel (%p205) target = $region36
        $region35: #{tpu_custom_call.1} parent=31 // pred_region
          %208 = dma.done %s201, 8192
        $region36: #{tpu_custom_call.1} parent=31 // pred_fallthru
          _
        %s209 = smul.u32 4, %s24
        %p210 = scmp.lt.s32.totalorder %s209, 3
        %s211 = scalar_select %p210, %s209, 3
        %s212 = smul.addr %s211, 2
        %s213 = smul.addr %s212, 4
        %s214 = scalar_lea.vmem %s0, %s213
        %p215 = pneg %p53
        %p216 = pneg %p50
        %s217 = sand.u32 %s66, 1
        %s218 = scalar_lea.sflag [#allocation3], %s217
        %s219 = sand.u32 %s66, 1
        %s220 = smul.addr %s219, 512
        %s221 = scalar_lea.vmem [#allocation2], %s220
        %p222 = pneg %p79
        %p223 = pneg %p76
        %s224 = smul.u32 4, %s24
        %p225 = scmp.lt.s32.totalorder %s224, 3
        %s226 = scalar_select %p225, %s224, 3
        %s227 = smul.addr %s226, 8
        %s228 = scalar_lea.vmem %s2, %s227
        %p229 = pneg %p105
        %p230 = pneg %p102
        %p231 = pneg %p133
        %p232 = pneg %p130
        %s233 = sand.u32 %s120, 1
        %s234 = scalar_lea.sflag [#allocation4], %s233
        %s235 = sand.u32 %s120, 1
        %s236 = smul.addr %s235, 128
        %s237 = scalar_lea.vmem [#allocation5], %s236
        %s238 = smul.u32 4, %s24
        %p239 = scmp.lt.s32.totalorder %s238, 3
        %s240 = scalar_select %p239, %s238, 3
        %s241 = smul.addr %s240, 2
        %s242 = smul.addr %s241, 4
        %s243 = scalar_lea.vmem %s0, %s242
        %s244 = smul.u32 4, %s24
        %s245 = smul.u32 64, %s25
        %s246 = smul.u32 4, %s24
        %p247 = scmp.lt.s32.totalorder %s246, 3
        %s248 = scalar_select %p247, %s246, 3
        %s249 = smul.addr %s248, 8
        %s250 = scalar_lea.vmem %s2, %s249
        %s251 = smul.u32 4, %s24
        %s252 = smul.u32 4, %s24
        %s253 = smul.u32 4, %s25
        %v254 = vld [vmem:[%s243] sm:$0xff]
        %v255 = vld [vmem:[%s243 + $0x8] sm:$0xff]
        %v256 = vld [vmem:[%s243 + $0x10] sm:$0xff]
        %v257 = vld [vmem:[%s243 + $0x18] sm:$0xff]
        %v258 = vld [vmem:[%s204] sm:$0xff]
        %v259 = vld [vmem:[%s204 + $0x8] sm:$0xff]
        %v260 = vld [vmem:[%s204 + $0x10] sm:$0xff]
        %v261 = vld [vmem:[%s204 + $0x18] sm:$0xff]
        %v262 = vld [vmem:[%s204 + $0x20] sm:$0xff]
        %v263 = vld [vmem:[%s204 + $0x28] sm:$0xff]
        %v264 = vld [vmem:[%s204 + $0x30] sm:$0xff]
        %v265 = vld [vmem:[%s204 + $0x38] sm:$0xff]
        %v266 = vld [vmem:[%s204 + $0x40] sm:$0xff]
        %v267 = vld [vmem:[%s204 + $0x48] sm:$0xff]
        %v268 = vld [vmem:[%s204 + $0x50] sm:$0xff]
        %v269 = vld [vmem:[%s204 + $0x58] sm:$0xff]
        %v270 = vld [vmem:[%s204 + $0x60] sm:$0xff]
        %v271 = vld [vmem:[%s204 + $0x68] sm:$0xff]
        %v272 = vld [vmem:[%s204 + $0x70] sm:$0xff]
        %v273 = vld [vmem:[%s204 + $0x78] sm:$0xff]
        %v274 = vld [vmem:[%s204 + $0x80] sm:$0xff]
        %v275 = vld [vmem:[%s204 + $0x88] sm:$0xff]
        %v276 = vld [vmem:[%s204 + $0x90] sm:$0xff]
        %v277 = vld [vmem:[%s204 + $0x98] sm:$0xff]
        %v278 = vld [vmem:[%s204 + $0xa0] sm:$0xff]
        %v279 = vld [vmem:[%s204 + $0xa8] sm:$0xff]
        %v280 = vld [vmem:[%s204 + $0xb0] sm:$0xff]
        %v281 = vld [vmem:[%s204 + $0xb8] sm:$0xff]
        %v282 = vld [vmem:[%s204 + $0xc0] sm:$0xff]
        %v283 = vld [vmem:[%s204 + $0xc8] sm:$0xff]
        %v284 = vld [vmem:[%s204 + $0xd0] sm:$0xff]
        %v285 = vld [vmem:[%s204 + $0xd8] sm:$0xff]
        %v286 = vld [vmem:[%s204 + $0xe0] sm:$0xff]
        %v287 = vld [vmem:[%s204 + $0xe8] sm:$0xff]
        %v288 = vld [vmem:[%s204 + $0xf0] sm:$0xff]
        %v289 = vld [vmem:[%s204 + $0xf8] sm:$0xff]
        %v290 = vld [vmem:[%s204 + $0x100] sm:$0xff]
        %v291 = vld [vmem:[%s204 + $0x108] sm:$0xff]
        %v292 = vld [vmem:[%s204 + $0x110] sm:$0xff]
        %v293 = vld [vmem:[%s204 + $0x118] sm:$0xff]
        %v294 = vld [vmem:[%s204 + $0x120] sm:$0xff]
        %v295 = vld [vmem:[%s204 + $0x128] sm:$0xff]
        %v296 = vld [vmem:[%s204 + $0x130] sm:$0xff]
        %v297 = vld [vmem:[%s204 + $0x138] sm:$0xff]
        %v298 = vld [vmem:[%s204 + $0x140] sm:$0xff]
        %v299 = vld [vmem:[%s204 + $0x148] sm:$0xff]
        %v300 = vld [vmem:[%s204 + $0x150] sm:$0xff]
        %v301 = vld [vmem:[%s204 + $0x158] sm:$0xff]
        %v302 = vld [vmem:[%s204 + $0x160] sm:$0xff]
        %v303 = vld [vmem:[%s204 + $0x168] sm:$0xff]
        %v304 = vld [vmem:[%s204 + $0x170] sm:$0xff]
        %v305 = vld [vmem:[%s204 + $0x178] sm:$0xff]
        %v306 = vld [vmem:[%s204 + $0x180] sm:$0xff]
        %v307 = vld [vmem:[%s204 + $0x188] sm:$0xff]
        %v308 = vld [vmem:[%s204 + $0x190] sm:$0xff]
        %v309 = vld [vmem:[%s204 + $0x198] sm:$0xff]
        %v310 = vld [vmem:[%s204 + $0x1a0] sm:$0xff]
        %v311 = vld [vmem:[%s204 + $0x1a8] sm:$0xff]
        %v312 = vld [vmem:[%s204 + $0x1b0] sm:$0xff]
        %v313 = vld [vmem:[%s204 + $0x1b8] sm:$0xff]
        %v314 = vld [vmem:[%s204 + $0x1c0] sm:$0xff]
        %v315 = vld [vmem:[%s204 + $0x1c8] sm:$0xff]
        %v316 = vld [vmem:[%s204 + $0x1d0] sm:$0xff]
        %v317 = vld [vmem:[%s204 + $0x1d8] sm:$0xff]
        %v318 = vld [vmem:[%s204 + $0x1e0] sm:$0xff]
        %v319 = vld [vmem:[%s204 + $0x1e8] sm:$0xff]
        %v320 = vld [vmem:[%s204 + $0x1f0] sm:$0xff]
        %v321 = vld [vmem:[%s204 + $0x1f8] sm:$0xff]
        %v326 = vunpack.c.l.b16 %v254
        %v327 = vunpack.c.h.b16 %v254
        %v328 = vunpack.c.l.b16 %v255
        %v329 = vunpack.c.h.b16 %v255
        %v330 = vunpack.c.l.b16 %v256
        %v331 = vunpack.c.h.b16 %v256
        %v332 = vunpack.c.l.b16 %v257
        %v333 = vunpack.c.h.b16 %v257
        %v334 = vpack.c.b16 %v328, %v326
        %v335 = vpack.c.b16 %v329, %v327
        %v336 = vpack.c.b16 %v332, %v330
        %v337 = vpack.c.b16 %v333, %v331
        %v406 = vunpack.c.l.b16 %v258
        %v407 = vunpack.c.h.b16 %v258
        %v408 = vunpack.c.l.b16 %v259
        %v409 = vunpack.c.h.b16 %v259
        %v410 = vunpack.c.l.b16 %v260
        %v411 = vunpack.c.h.b16 %v260
        %v412 = vunpack.c.l.b16 %v261
        %v413 = vunpack.c.h.b16 %v261
        %v414 = vunpack.c.l.b16 %v262
        %v415 = vunpack.c.h.b16 %v262
        %v416 = vunpack.c.l.b16 %v263
        %v417 = vunpack.c.h.b16 %v263
        %v418 = vunpack.c.l.b16 %v264
        %v419 = vunpack.c.h.b16 %v264
        %v420 = vunpack.c.l.b16 %v265
        %v421 = vunpack.c.h.b16 %v265
        %v422 = vunpack.c.l.b16 %v266
        %v423 = vunpack.c.h.b16 %v266
        %v424 = vunpack.c.l.b16 %v267
        %v425 = vunpack.c.h.b16 %v267
        %v426 = vunpack.c.l.b16 %v268
        %v427 = vunpack.c.h.b16 %v268
        %v428 = vunpack.c.l.b16 %v269
        %v429 = vunpack.c.h.b16 %v269
        %v430 = vunpack.c.l.b16 %v270
        %v431 = vunpack.c.h.b16 %v270
        %v432 = vunpack.c.l.b16 %v271
        %v433 = vunpack.c.h.b16 %v271
        %v434 = vunpack.c.l.b16 %v272
        %v435 = vunpack.c.h.b16 %v272
        %v436 = vunpack.c.l.b16 %v273
        %v437 = vunpack.c.h.b16 %v273
        %v438 = vunpack.c.l.b16 %v274
        %v439 = vunpack.c.h.b16 %v274
        %v440 = vunpack.c.l.b16 %v275
        %v441 = vunpack.c.h.b16 %v275
        %v442 = vunpack.c.l.b16 %v276
        %v443 = vunpack.c.h.b16 %v276
        %v444 = vunpack.c.l.b16 %v277
        %v445 = vunpack.c.h.b16 %v277
        %v446 = vunpack.c.l.b16 %v278
        %v447 = vunpack.c.h.b16 %v278
        %v448 = vunpack.c.l.b16 %v279
        %v449 = vunpack.c.h.b16 %v279
        %v450 = vunpack.c.l.b16 %v280
        %v451 = vunpack.c.h.b16 %v280
        %v452 = vunpack.c.l.b16 %v281
        %v453 = vunpack.c.h.b16 %v281
        %v454 = vunpack.c.l.b16 %v282
        %v455 = vunpack.c.h.b16 %v282
        %v456 = vunpack.c.l.b16 %v283
        %v457 = vunpack.c.h.b16 %v283
        %v458 = vunpack.c.l.b16 %v284
        %v459 = vunpack.c.h.b16 %v284
        %v460 = vunpack.c.l.b16 %v285
        %v461 = vunpack.c.h.b16 %v285
        %v462 = vunpack.c.l.b16 %v286
        %v463 = vunpack.c.h.b16 %v286
        %v464 = vunpack.c.l.b16 %v287
        %v465 = vunpack.c.h.b16 %v287
        %v466 = vunpack.c.l.b16 %v288
        %v467 = vunpack.c.h.b16 %v288
        %v468 = vunpack.c.l.b16 %v289
        %v469 = vunpack.c.h.b16 %v289
        %v470 = vunpack.c.l.b16 %v290
        %v471 = vunpack.c.h.b16 %v290
        %v472 = vunpack.c.l.b16 %v291
        %v473 = vunpack.c.h.b16 %v291
        %v474 = vunpack.c.l.b16 %v292
        %v475 = vunpack.c.h.b16 %v292
        %v476 = vunpack.c.l.b16 %v293
        %v477 = vunpack.c.h.b16 %v293
        %v478 = vunpack.c.l.b16 %v294
        %v479 = vunpack.c.h.b16 %v294
        %v480 = vunpack.c.l.b16 %v295
        %v481 = vunpack.c.h.b16 %v295
        %v482 = vunpack.c.l.b16 %v296
        %v483 = vunpack.c.h.b16 %v296
        %v484 = vunpack.c.l.b16 %v297
        %v485 = vunpack.c.h.b16 %v297
        %v486 = vunpack.c.l.b16 %v298
        %v487 = vunpack.c.h.b16 %v298
        %v488 = vunpack.c.l.b16 %v299
        %v489 = vunpack.c.h.b16 %v299
        %v490 = vunpack.c.l.b16 %v300
        %v491 = vunpack.c.h.b16 %v300
        %v492 = vunpack.c.l.b16 %v301
        %v493 = vunpack.c.h.b16 %v301
        %v494 = vunpack.c.l.b16 %v302
        %v495 = vunpack.c.h.b16 %v302
        %v496 = vunpack.c.l.b16 %v303
        %v497 = vunpack.c.h.b16 %v303
        %v498 = vunpack.c.l.b16 %v304
        %v499 = vunpack.c.h.b16 %v304
        %v500 = vunpack.c.l.b16 %v305
        %v501 = vunpack.c.h.b16 %v305
        %v502 = vunpack.c.l.b16 %v306
        %v503 = vunpack.c.h.b16 %v306
        %v504 = vunpack.c.l.b16 %v307
        %v505 = vunpack.c.h.b16 %v307
        %v506 = vunpack.c.l.b16 %v308
        %v507 = vunpack.c.h.b16 %v308
        %v508 = vunpack.c.l.b16 %v309
        %v509 = vunpack.c.h.b16 %v309
        %v510 = vunpack.c.l.b16 %v310
        %v511 = vunpack.c.h.b16 %v310
        %v512 = vunpack.c.l.b16 %v311
        %v513 = vunpack.c.h.b16 %v311
        %v514 = vunpack.c.l.b16 %v312
        %v515 = vunpack.c.h.b16 %v312
        %v516 = vunpack.c.l.b16 %v313
        %v517 = vunpack.c.h.b16 %v313
        %v518 = vunpack.c.l.b16 %v314
        %v519 = vunpack.c.h.b16 %v314
        %v520 = vunpack.c.l.b16 %v315
        %v521 = vunpack.c.h.b16 %v315
        %v522 = vunpack.c.l.b16 %v316
        %v523 = vunpack.c.h.b16 %v316
        %v524 = vunpack.c.l.b16 %v317
        %v525 = vunpack.c.h.b16 %v317
        %v526 = vunpack.c.l.b16 %v318
        %v527 = vunpack.c.h.b16 %v318
        %v528 = vunpack.c.l.b16 %v319
        %v529 = vunpack.c.h.b16 %v319
        %v530 = vunpack.c.l.b16 %v320
        %v531 = vunpack.c.h.b16 %v320
        %v532 = vunpack.c.l.b16 %v321
        %v533 = vunpack.c.h.b16 %v321
        %v534 = vpack.c.b16 %v408, %v406
        %v535 = vpack.c.b16 %v409, %v407
        %v536 = vpack.c.b16 %v412, %v410
        %v537 = vpack.c.b16 %v413, %v411
        %v538 = vpack.c.b16 %v416, %v414
        %v539 = vpack.c.b16 %v417, %v415
        %v540 = vpack.c.b16 %v420, %v418
        %v541 = vpack.c.b16 %v421, %v419
        %v542 = vpack.c.b16 %v424, %v422
        %v543 = vpack.c.b16 %v425, %v423
        %v544 = vpack.c.b16 %v428, %v426
        %v545 = vpack.c.b16 %v429, %v427
        %v546 = vpack.c.b16 %v432, %v430
        %v547 = vpack.c.b16 %v433, %v431
        %v548 = vpack.c.b16 %v436, %v434
        %v549 = vpack.c.b16 %v437, %v435
        %v550 = vpack.c.b16 %v440, %v438
        %v551 = vpack.c.b16 %v441, %v439
        %v552 = vpack.c.b16 %v444, %v442
        %v553 = vpack.c.b16 %v445, %v443
        %v554 = vpack.c.b16 %v448, %v446
        %v555 = vpack.c.b16 %v449, %v447
        %v556 = vpack.c.b16 %v452, %v450
        %v557 = vpack.c.b16 %v453, %v451
        %v558 = vpack.c.b16 %v456, %v454
        %v559 = vpack.c.b16 %v457, %v455
        %v560 = vpack.c.b16 %v460, %v458
        %v561 = vpack.c.b16 %v461, %v459
        %v562 = vpack.c.b16 %v464, %v462
        %v563 = vpack.c.b16 %v465, %v463
        %v564 = vpack.c.b16 %v468, %v466
        %v565 = vpack.c.b16 %v469, %v467
        %v566 = vpack.c.b16 %v472, %v470
        %v567 = vpack.c.b16 %v473, %v471
        %v568 = vpack.c.b16 %v476, %v474
        %v569 = vpack.c.b16 %v477, %v475
        %v570 = vpack.c.b16 %v480, %v478
        %v571 = vpack.c.b16 %v481, %v479
        %v572 = vpack.c.b16 %v484, %v482
        %v573 = vpack.c.b16 %v485, %v483
        %v574 = vpack.c.b16 %v488, %v486
        %v575 = vpack.c.b16 %v489, %v487
        %v576 = vpack.c.b16 %v492, %v490
        %v577 = vpack.c.b16 %v493, %v491
        %v578 = vpack.c.b16 %v496, %v494
        %v579 = vpack.c.b16 %v497, %v495
        %v580 = vpack.c.b16 %v500, %v498
        %v581 = vpack.c.b16 %v501, %v499
        %v582 = vpack.c.b16 %v504, %v502
        %v583 = vpack.c.b16 %v505, %v503
        %v584 = vpack.c.b16 %v508, %v506
        %v585 = vpack.c.b16 %v509, %v507
        %v586 = vpack.c.b16 %v512, %v510
        %v587 = vpack.c.b16 %v513, %v511
        %v588 = vpack.c.b16 %v516, %v514
        %v589 = vpack.c.b16 %v517, %v515
        %v590 = vpack.c.b16 %v520, %v518
        %v591 = vpack.c.b16 %v521, %v519
        %v592 = vpack.c.b16 %v524, %v522
        %v593 = vpack.c.b16 %v525, %v523
        %v594 = vpack.c.b16 %v528, %v526
        %v595 = vpack.c.b16 %v529, %v527
        %v596 = vpack.c.b16 %v532, %v530
        %v597 = vpack.c.b16 %v533, %v531
        %662 = vmatprep.subr.bf16.mxu0 %v535
        %663 = vmatpush1.bf16.xpose.msra.mxu0 %v534
        %664 = vmatprep.subr.bf16.mxu0 %v537
        %665 = vmatpush1.bf16.xpose.msra.mxu0 %v536
        %666 = vmatprep.subr.bf16.mxu0 %v539
        %667 = vmatpush1.bf16.xpose.msra.mxu0 %v538
        %668 = vmatprep.subr.bf16.mxu0 %v541
        %669 = vmatpush1.bf16.xpose.msra.mxu0 %v540
        %670 = vmatprep.subr.bf16.mxu0 %v543
        %671 = vmatpush1.bf16.xpose.msra.mxu0 %v542
        %672 = vmatprep.subr.bf16.mxu0 %v545
        %673 = vmatpush1.bf16.xpose.msra.mxu0 %v544
        %674 = vmatprep.subr.bf16.mxu0 %v547
        %675 = vmatpush1.bf16.xpose.msra.mxu0 %v546
        %676 = vmatprep.subr.bf16.mxu0 %v549
        %677 = vmatpush1.bf16.xpose.msra.mxu0 %v548
        %678 = vmatprep.subr.bf16.mxu0 %v551
        %679 = vmatpush1.bf16.xpose.msra.mxu0 %v550
        %680 = vmatprep.subr.bf16.mxu0 %v553
        %681 = vmatpush1.bf16.xpose.msra.mxu0 %v552
        %682 = vmatprep.subr.bf16.mxu0 %v555
        %683 = vmatpush1.bf16.xpose.msra.mxu0 %v554
        %684 = vmatprep.subr.bf16.mxu0 %v557
        %685 = vmatpush1.bf16.xpose.msra.mxu0 %v556
        %686 = vmatprep.subr.bf16.mxu0 %v559
        %687 = vmatpush1.bf16.xpose.msra.mxu0 %v558
        %688 = vmatprep.subr.bf16.mxu0 %v561
        %689 = vmatpush1.bf16.xpose.msra.mxu0 %v560
        %690 = vmatprep.subr.bf16.mxu0 %v563
        %691 = vmatpush1.bf16.xpose.msra.mxu0 %v562
        %692 = vmatprep.subr.bf16.mxu0 %v565
        %693 = vmatpush1.bf16.xpose.msra.mxu0 %v564
        %694 = vmatprep.mubr.bf16.mxu0 %v335
        %695 = vmatmul.mubr.bf16.gmra.mrb[0].mxu0 %v334
        %v696 = vpop.f32.mrb[0].mxu0
        %v697 = vadd.f32 0.0, %v696
        %v698 = vpop.f32.mrb[0].mxu0
        %v699 = vadd.f32 0.0, %v698
        %v700 = vpop.f32.mrb[0].mxu0
        %v701 = vadd.f32 0.0, %v700
        %v702 = vpop.f32.mrb[0].mxu0
        %v703 = vadd.f32 0.0, %v702
        %704 = vmatprep.mubr.bf16.mxu0 %v337
        %705 = vmatmul.mubr.bf16.gmra.mrb[0].mxu0 %v336
        %v706 = vpop.f32.mrb[0].mxu0
        %v707 = vadd.f32 0.0, %v706
        %v708 = vpop.f32.mrb[0].mxu0
        %v709 = vadd.f32 0.0, %v708
        %v710 = vpop.f32.mrb[0].mxu0
        %v711 = vadd.f32 0.0, %v710
        %v712 = vpop.f32.mrb[0].mxu0
        %v713 = vadd.f32 0.0, %v712
        %714 = vdwg.mxu0
        %715 = vmatprep.subr.bf16.mxu0 %v567
        %716 = vmatpush1.bf16.xpose.msra.mxu0 %v566
        %717 = vmatprep.subr.bf16.mxu0 %v569
        %718 = vmatpush1.bf16.xpose.msra.mxu0 %v568
        %719 = vmatprep.subr.bf16.mxu0 %v571
        %720 = vmatpush1.bf16.xpose.msra.mxu0 %v570
        %721 = vmatprep.subr.bf16.mxu0 %v573
        %722 = vmatpush1.bf16.xpose.msra.mxu0 %v572
        %723 = vmatprep.subr.bf16.mxu0 %v575
        %724 = vmatpush1.bf16.xpose.msra.mxu0 %v574
        %725 = vmatprep.subr.bf16.mxu0 %v577
        %726 = vmatpush1.bf16.xpose.msra.mxu0 %v576
        %727 = vmatprep.subr.bf16.mxu0 %v579
        %728 = vmatpush1.bf16.xpose.msra.mxu0 %v578
        %729 = vmatprep.subr.bf16.mxu0 %v581
        %730 = vmatpush1.bf16.xpose.msra.mxu0 %v580
        %731 = vmatprep.subr.bf16.mxu0 %v583
        %732 = vmatpush1.bf16.xpose.msra.mxu0 %v582
        %733 = vmatprep.subr.bf16.mxu0 %v585
        %734 = vmatpush1.bf16.xpose.msra.mxu0 %v584
        %735 = vmatprep.subr.bf16.mxu0 %v587
        %736 = vmatpush1.bf16.xpose.msra.mxu0 %v586
        %737 = vmatprep.subr.bf16.mxu0 %v589
        %738 = vmatpush1.bf16.xpose.msra.mxu0 %v588
        %739 = vmatprep.subr.bf16.mxu0 %v591
        %740 = vmatpush1.bf16.xpose.msra.mxu0 %v590
        %741 = vmatprep.subr.bf16.mxu0 %v593
        %742 = vmatpush1.bf16.xpose.msra.mxu0 %v592
        %743 = vmatprep.subr.bf16.mxu0 %v595
        %744 = vmatpush1.bf16.xpose.msra.mxu0 %v594
        %745 = vmatprep.subr.bf16.mxu0 %v597
        %746 = vmatpush1.bf16.xpose.msra.mxu0 %v596
        %747 = vmatprep.mubr.bf16.mxu0 %v335
        %748 = vmatmul.mubr.bf16.gmra.mrb[0].mxu0 %v334
        %v749 = vpop.f32.mrb[0].mxu0
        %v750 = vadd.f32 0.0, %v749
        %v751 = vpop.f32.mrb[0].mxu0
        %v752 = vadd.f32 0.0, %v751
        %v753 = vpop.f32.mrb[0].mxu0
        %v754 = vadd.f32 0.0, %v753
        %v755 = vpop.f32.mrb[0].mxu0
        %v756 = vadd.f32 0.0, %v755
        %757 = vmatprep.mubr.bf16.mxu0 %v337
        %758 = vmatmul.mubr.bf16.gmra.mrb[0].mxu0 %v336
        %v759 = vpop.f32.mrb[0].mxu0
        %v760 = vadd.f32 0.0, %v759
        %v761 = vpop.f32.mrb[0].mxu0
        %v762 = vadd.f32 0.0, %v761
        %v763 = vpop.f32.mrb[0].mxu0
        %v764 = vadd.f32 0.0, %v763
        %v765 = vpop.f32.mrb[0].mxu0
        %v766 = vadd.f32 0.0, %v765
        %767 = vdwg.mxu0
        %s768 = smul.u32 %s25, 512
        %v769 = vlaneseq
        %v770 = vand.u32 %v769, 127
        %v771 = vadd.s32 %v770, 128
        %v772 = vadd.s32 %v770, 256
        %v773 = vadd.s32 %v770, 384
        %v774 = vld [vmem:[%s250] sm:$0xff]
        %v775 = vld [vmem:[%s250 + $0x8] sm:$0xff]
        %v776 = vld [vmem:[%s250 + $0x10] sm:$0xff]
        %v777 = vld [vmem:[%s250 + $0x18] sm:$0xff]
        %v778 = vstv %s768
        %v779 = vsub.s32 %v774, %v778
        %v780 = vsub.s32 %v775, %v778
        %v781 = vsub.s32 %v776, %v778
        %v782 = vsub.s32 %v777, %v778
        %783 = vset.pattern.permute.xlu0 0
        %784 = vperm.xlu0 %783, %v779
        %v785 = vpop.permute.xlu0 %784
        %786 = vset.pattern.permute.xlu0 0
        %787 = vperm.xlu0 %786, %v780
        %v788 = vpop.permute.xlu0 %787
        %789 = vset.pattern.permute.xlu0 0
        %790 = vperm.xlu0 %789, %v781
        %v791 = vpop.permute.xlu0 %790
        %792 = vset.pattern.permute.xlu0 0
        %793 = vperm.xlu0 %792, %v782
        %v794 = vpop.permute.xlu0 %793
        %vm795 = vcmp.eq.s32.totalorder %v770, %v785
        %vm796 = vcmp.eq.s32.totalorder %v771, %v785
        %vm797 = vcmp.eq.s32.totalorder %v772, %v785
        %vm798 = vcmp.eq.s32.totalorder %v773, %v785
        %vm799 = vcmp.eq.s32.totalorder %v770, %v788
        %vm800 = vcmp.eq.s32.totalorder %v771, %v788
        %vm801 = vcmp.eq.s32.totalorder %v772, %v788
        %vm802 = vcmp.eq.s32.totalorder %v773, %v788
        %vm803 = vcmp.eq.s32.totalorder %v770, %v791
        %vm804 = vcmp.eq.s32.totalorder %v771, %v791
        %vm805 = vcmp.eq.s32.totalorder %v772, %v791
        %vm806 = vcmp.eq.s32.totalorder %v773, %v791
        %vm807 = vcmp.eq.s32.totalorder %v770, %v794
        %vm808 = vcmp.eq.s32.totalorder %v771, %v794
        %vm809 = vcmp.eq.s32.totalorder %v772, %v794
        %vm810 = vcmp.eq.s32.totalorder %v773, %v794
        %v811 = vsel %vm795, %v697, 0.0
        %v812 = vsel %vm796, %v699, 0.0
        %v813 = vsel %vm797, %v750, 0.0
        %v814 = vsel %vm798, %v752, 0.0
        %v815 = vsel %vm799, %v701, 0.0
        %v816 = vsel %vm800, %v703, 0.0
        %v817 = vsel %vm801, %v754, 0.0
        %v818 = vsel %vm802, %v756, 0.0
        %v819 = vsel %vm803, %v707, 0.0
        %v820 = vsel %vm804, %v709, 0.0
        %v821 = vsel %vm805, %v760, 0.0
        %v822 = vsel %vm806, %v762, 0.0
        %v823 = vsel %vm807, %v711, 0.0
        %v824 = vsel %vm808, %v713, 0.0
        %v825 = vsel %vm809, %v764, 0.0
        %v826 = vsel %vm810, %v766, 0.0
        %v827 = vadd.f32 %v811, %v812
        %v828 = vadd.f32 %v827, %v813
        %v829 = vadd.f32 %v828, %v814
        %830 = vadd.xlane.f32.xlu0 %v829
        %v831 = vpop.xlane.xlu0 %830
        %v832 = vadd.f32 %v815, %v816
        %v833 = vadd.f32 %v832, %v817
        %v834 = vadd.f32 %v833, %v818
        %835 = vadd.xlane.f32.xlu0 %v834
        %v836 = vpop.xlane.xlu0 %835
        %v837 = vadd.f32 %v819, %v820
        %v838 = vadd.f32 %v837, %v821
        %v839 = vadd.f32 %v838, %v822
        %840 = vadd.xlane.f32.xlu0 %v839
        %v841 = vpop.xlane.xlu0 %840
        %v842 = vadd.f32 %v823, %v824
        %v843 = vadd.f32 %v842, %v825
        %v844 = vadd.f32 %v843, %v826
        %845 = vadd.xlane.f32.xlu0 %v844
        %v846 = vpop.xlane.xlu0 %845
        %v847 = vmul.f32 %v831, %v831
        %v848 = vmul.f32 %v836, %v836
        %v849 = vmul.f32 %v841, %v841
        %v850 = vmul.f32 %v846, %v846
        %v851 = vsub.f32 1.0, %v847
        %v852 = vsub.f32 1.0, %v848
        %v853 = vsub.f32 1.0, %v849
        %v854 = vsub.f32 1.0, %v850
        %v855 = vmax.f32 %v851, 0.0
        %v856 = vmax.f32 %v852, 0.0
        %v857 = vmax.f32 %v853, 0.0
        %v858 = vmax.f32 %v854, 0.0
        %v859 = vmin.f32 %v855, 1.0
        %v860 = vmin.f32 %v856, 1.0
        %v861 = vmin.f32 %v857, 1.0
        %v862 = vmin.f32 %v858, 1.0
        %v863 = vrsqrt.pop %v859
        %v864 = vmul.f32 %v859, %v863
        %vm865 = vcmp.eq.f32.partialorder %v859, inf
        %v866 = vsel %vm865, %v859, %v864
        %vm867 = vcmp.eq.f32.partialorder %v859, 0.0
        %v868 = vand.u32 %v859, 2147483648
        %v869 = vsel %vm867, %v868, %v866
        %v870 = vrsqrt.pop %v860
        %v871 = vmul.f32 %v860, %v870
        %vm872 = vcmp.eq.f32.partialorder %v860, inf
        %v873 = vsel %vm872, %v860, %v871
        %vm874 = vcmp.eq.f32.partialorder %v860, 0.0
        %v875 = vand.u32 %v860, 2147483648
        %v876 = vsel %vm874, %v875, %v873
        %v877 = vrsqrt.pop %v861
        %v878 = vmul.f32 %v861, %v877
        %vm879 = vcmp.eq.f32.partialorder %v861, inf
        %v880 = vsel %vm879, %v861, %v878
        %vm881 = vcmp.eq.f32.partialorder %v861, 0.0
        %v882 = vand.u32 %v861, 2147483648
        %v883 = vsel %vm881, %v882, %v880
        %v884 = vrsqrt.pop %v862
        %v885 = vmul.f32 %v862, %v884
        %vm886 = vcmp.eq.f32.partialorder %v862, inf
        %v887 = vsel %vm886, %v862, %v885
        %vm888 = vcmp.eq.f32.partialorder %v862, 0.0
        %v889 = vand.u32 %v862, 2147483648
        %v890 = vsel %vm888, %v889, %v887
        %v891 = vmul.f32 %v831, 0.87758255
        %v892 = vmul.f32 %v836, 0.87758255
        %v893 = vmul.f32 %v841, 0.87758255
        %v894 = vmul.f32 %v846, 0.87758255
        %v895 = vmul.f32 %v869, 0.47942555
        %v896 = vmul.f32 %v876, 0.47942555
        %v897 = vmul.f32 %v883, 0.47942555
        %v898 = vmul.f32 %v890, 0.47942555
        %v899 = vsub.f32 %v891, %v895
        %v900 = vsub.f32 %v892, %v896
        %v901 = vsub.f32 %v893, %v897
        %v902 = vsub.f32 %v894, %v898
        %vm903 = vcmp.gt.f32.partialorder %v831, -0.87758255
        %vm904 = vcmp.gt.f32.partialorder %v836, -0.87758255
        %vm905 = vcmp.gt.f32.partialorder %v841, -0.87758255
        %vm906 = vcmp.gt.f32.partialorder %v846, -0.87758255
        %v907 = vsub.f32 %v831, 0.23971277
        %v908 = vsub.f32 %v836, 0.23971277
        %v909 = vsub.f32 %v841, 0.23971277
        %v910 = vsub.f32 %v846, 0.23971277
        %v911 = vsel %vm903, %v899, %v907
        %v912 = vsel %vm904, %v900, %v908
        %v913 = vsel %vm905, %v901, %v909
        %v914 = vsel %vm906, %v902, %v910
        %v915 = vsel %vm795, %v911, %v697
        %v916 = vsel %vm796, %v911, %v699
        %v917 = vsel %vm797, %v911, %v750
        %v918 = vsel %vm798, %v911, %v752
        %v919 = vsel %vm799, %v912, %v701
        %v920 = vsel %vm800, %v912, %v703
        %v921 = vsel %vm801, %v912, %v754
        %v922 = vsel %vm802, %v912, %v756
        %v923 = vsel %vm803, %v913, %v707
        %v924 = vsel %vm804, %v913, %v709
        %v925 = vsel %vm805, %v913, %v760
        %v926 = vsel %vm806, %v913, %v762
        %v927 = vsel %vm807, %v914, %v711
        %v928 = vsel %vm808, %v914, %v713
        %v929 = vsel %vm809, %v914, %v764
        %v930 = vsel %vm810, %v914, %v766
        %v931 = vmul.f32 %v915, 30.0
        %v932 = vmul.f32 %v916, 30.0
        %v933 = vmul.f32 %v917, 30.0
        %v934 = vmul.f32 %v918, 30.0
        %v935 = vmul.f32 %v919, 30.0
        %v936 = vmul.f32 %v920, 30.0
        %v937 = vmul.f32 %v921, 30.0
        %v938 = vmul.f32 %v922, 30.0
        %v939 = vmul.f32 %v923, 30.0
        %v940 = vmul.f32 %v924, 30.0
        %v941 = vmul.f32 %v925, 30.0
        %v942 = vmul.f32 %v926, 30.0
        %v943 = vmul.f32 %v927, 30.0
        %v944 = vmul.f32 %v928, 30.0
        %v945 = vmul.f32 %v929, 30.0
        %v946 = vmul.f32 %v930, 30.0
        %947 = vst [vmem:[%s237] sm:$0xff] %v931
        %948 = vst [vmem:[%s237 + $0x8] sm:$0xff] %v932
        %949 = vst [vmem:[%s237 + $0x10] sm:$0xff] %v933
        %950 = vst [vmem:[%s237 + $0x18] sm:$0xff] %v934
        %951 = vst [vmem:[%s237 + $0x20] sm:$0xff] %v935
        %952 = vst [vmem:[%s237 + $0x28] sm:$0xff] %v936
        %953 = vst [vmem:[%s237 + $0x30] sm:$0xff] %v937
        %954 = vst [vmem:[%s237 + $0x38] sm:$0xff] %v938
        %955 = vst [vmem:[%s237 + $0x40] sm:$0xff] %v939
        %956 = vst [vmem:[%s237 + $0x48] sm:$0xff] %v940
        %957 = vst [vmem:[%s237 + $0x50] sm:$0xff] %v941
        %958 = vst [vmem:[%s237 + $0x58] sm:$0xff] %v942
        %959 = vst [vmem:[%s237 + $0x60] sm:$0xff] %v943
        %960 = vst [vmem:[%s237 + $0x68] sm:$0xff] %v944
        %961 = vst [vmem:[%s237 + $0x70] sm:$0xff] %v945
        %962 = vst [vmem:[%s237 + $0x78] sm:$0xff] %v946
        %s963 = sand.u32 %s120, 1
        %s964 = scalar_lea.sflag [#allocation4], %s963
        %s965 = sand.u32 %s120, 1
        %s966 = smul.addr %s965, 128
        %s967 = scalar_lea.vmem [#allocation5], %s966
        // Predicated region
        $region37: #{tpu_custom_call.1} parent=31 // pred_check
          %p968 = pneg %p130
        $region38: #{tpu_custom_call.1} parent=31 // pred_check_branch
          %970 = sbr.rel (%p968) target = $region40
        $region39: #{tpu_custom_call.1} parent=31 // pred_region
          %s971 = smul.u32 4, %s24
          %s972 = smul.u32 4, %s25
          %s974 = ssub.s32 2048, 2048
          %975 = vsyncadd %s964, %s974
          %s976 = smul.addr %s971, 8
          %s977 = sadd.s32 %s972, %s976
          %s978 = smul.addr %s977, 128
          %s979 = scalar_lea.hbm %s3, %s978
          %s980 = sshll.u32 %s967, 4
          %s981 = int_to_ptr.vmem [resolvable:$true] %s980
          %986 = dma.vmem_to_hbm [thread:$0]  %s981, 2048, %s979, %s964, 512, 1024, 32
        $region40: #{tpu_custom_call.1} parent=31 // pred_fallthru
          _
      $region32: #{tpu_custom_call.1} parent=5 // pred_fallthru
        _
      %p987 = scmp.le.s32.totalorder 2, %s15
      // Predicated region
      $region41: #{tpu_custom_call.1} parent=5 // pred_check
        %p988 = pneg %p987
      $region42: #{tpu_custom_call.1} parent=5 // pred_check_branch
        %990 = sbr.rel (%p988) target = $region44
      $region43: #{tpu_custom_call.1} parent=5 // pred_region
        %s991 = ssub.s32 %s15, 2
        // Predicated region
        $region45: #{tpu_custom_call.1} parent=43 // pred_check
          %p992 = pneg %p136
        $region46: #{tpu_custom_call.1} parent=43 // pred_check_branch
          %994 = sbr.rel (%p992) target = $region48
        $region47: #{tpu_custom_call.1} parent=43 // pred_region
          %s995 = sand.u32 %s121, 1
          %s996 = scalar_lea.sflag [#allocation4], %s995
          %s997 = sand.u32 %s121, 1
          %s998 = smul.addr %s997, 128
          %s999 = scalar_lea.vmem [#allocation5], %s998
          %1000 = dma.done %s996, 2048
        $region48: #{tpu_custom_call.1} parent=43 // pred_fallthru
          _
      $region44: #{tpu_custom_call.1} parent=5 // pred_fallthru
        _
    $region6: #{tpu_custom_call.1} parent=1 // loop_footer
      %s19 = sadd.s32 1, %s15
    $region7: #{tpu_custom_call.1} parent=1 // loop_footer_branch
      %14 = sbr.rel target = $region3
    $region8: #{tpu_custom_call.1} parent=1 // loop_exit
      _
    %1001 = vsyncpa [#allocation3], 1
    %s1002 = scalar_lea.sflag [#allocation3], 1
    %1003 = vsyncpa %s1002, 1
    %1004 = vsyncpa [#allocation4], 1
    %s1005 = scalar_lea.sflag [#allocation4], 1
    %1006 = vsyncpa %s1005, 1

</llo_original>
